<compile_context>
chip_gen: v7x
topology: tpu7x:2x2x1
jax: 0.10.0
libtpu: 0.0.40
codegen_flags: <defaults>
</compile_context>

<pallas_src>
import functools

import jax
import jax.numpy as jnp
from jax import lax
from jax.experimental import pallas as pl
from jax.experimental.pallas import tpu as pltpu


def _round_up(v, m):
    return ((v + m - 1) // m) * m


def _pad_to(arr, shape):
    """Zero-pad each axis of `arr` up to `shape`."""
    pads = [(0, s - d) for s, d in zip(shape, arr.shape)]
    if all(p == (0, 0) for p in pads):
        return arr
    return jnp.pad(arr, pads)


# ---------------------------------------------------------------------------
# Pallas kernel: grid = (graph, layer); one GCN layer per grid step.
# ---------------------------------------------------------------------------
def _graph_layer_kernel(*refs, num_layers, dim_reduction, num_nodes, h_dim,
                        eps=1e-5):
    if dim_reduction:
        (x_ref, a_ref, wr_ref, br_ref, wl_ref, lp_ref, ap_ref,
         out_ref, xs_ref) = refs
    else:
        (x_ref, a_ref, wl_ref, lp_ref, ap_ref, out_ref, xs_ref) = refs

    l_idx = pl.program_id(1)
    n_pad, h_pad = xs_ref.shape
    inv_h = 1.0 / float(h_dim)

    # ---- layer 0: (re)initialize the carried node features for this graph ----
    @pl.when(l_idx == 0)
    def _():
        x0 = x_ref[0]                                   # (Np, Dp) f32
        if dim_reduction:
            w = wr_ref[0]                               # (Dp, Hp) mxu dtype
            x0 = jnp.dot(x0.astype(w.dtype), w,
                         preferred_element_type=jnp.float32) + br_ref[0]
        xs_ref[...] = x0                                # (Np, Hp) f32 carry

    # ---- one GCN layer: A_hat @ (X @ W) + b, LayerNorm, ReLU, residual ------
    x = xs_ref[...]                                     # (Np, Hp) f32
    a = a_ref[0]                                        # (Np, Np) mxu dtype
    w = wl_ref[0, 0]                                    # (Hp, Hp) mxu dtype
    bl = lp_ref[0, 0, 0]                                # (Hp,) f32
    gam = lp_ref[0, 0, 1]
    bet = lp_ref[0, 0, 2]

    h1 = jnp.dot(x.astype(w.dtype), w, preferred_element_type=jnp.float32)
    conv = jnp.dot(a, h1.astype(a.dtype),
                   preferred_element_type=jnp.float32) + bl

    # LayerNorm over the true h_dim features.  Padded columns of `conv` are
    # exactly zero (W / b / gamma / beta padding stays zero, also in bf16), so
    # var = E[x^2] - mu^2 is exact and no feature mask is needed.
    mu = jnp.sum(conv, axis=-1, keepdims=True) * inv_h
    msq = jnp.sum(conv * conv, axis=-1, keepdims=True) * inv_h
    var = jnp.maximum(msq - mu * mu, 0.0)
    ln = (conv - mu) * lax.rsqrt(var + eps)
    ln = ln * gam + bet                                 # padded cols -> 0
    ln = jnp.maximum(ln, 0.0)                           # ReLU
    xs_ref[...] = x + ln                                # residual

    # ---- last layer: shared attention_fc + node softmax readout -------------
    @pl.when(l_idx == num_layers - 1)
    def _():
        xf = xs_ref[...]
        ap = ap_ref[0]                                  # (2, Hp) f32
        wa = ap[0:1, :]                                 # (1, Hp)
        ba = ap[1:2, 0:1]                               # (1, 1)
        scores = jnp.sum(xf * wa, axis=-1, keepdims=True) + ba
        row = lax.broadcasted_iota(jnp.int32, (n_pad, 1), 0)
        scores = jnp.where(row < num_nodes, scores, -1e30)   # mask padded nodes
        m = jnp.max(scores, axis=0, keepdims=True)
        e = jnp.exp(scores - m)
        denom = jnp.sum(e, axis=0, keepdims=True)
        # EUP approx reciprocal + one Newton step (keeps f32 accuracy, frees VALU).
        r = pl.reciprocal(denom, approx=True)
        r = r * (2.0 - denom * r)
        attn = e * r
        out_ref[...] = jnp.sum(attn * xf, axis=0, keepdims=True)   # (1, Hp)


# ---------------------------------------------------------------------------
# Wrappers
# ---------------------------------------------------------------------------
def build_gcn_adj(edge_index, num_nodes):
    """Dense A_hat = D^-1/2 (A + I) D^-1/2, A[dst, src] accumulating edge
    multiplicity (matches torch_geometric GCNConv message passing)."""
    src, dst = edge_index[0], edge_index[1]
    adj = jnp.zeros((num_nodes, num_nodes), jnp.float32)
    adj = adj.at[dst, src].add(1.0)
    adj = adj + jnp.eye(num_nodes, dtype=jnp.float32)
    deg = jnp.sum(adj, axis=1)
    dinv = 1.0 / jnp.sqrt(jnp.maximum(deg, 1.0))
    return adj * dinv[:, None] * dinv[None, :]


def multi_graph_forward(x_all, a_all, params, *, num_layers, dim_reduction,
                        mxu_dtype=jnp.bfloat16):
    G, N, Din = x_all.shape
    L = num_layers
    H = params["wr"].shape[-1] if dim_reduction else Din
    C = params["wc"].shape[-1]

    Np = _round_up(N, 8)
    Hp = _round_up(H, 128)
    Dp = _round_up(Din, 128) if dim_reduction else Hp
    # TODO(synk): at large N, also pad Np toward 128 / tile the node axis for
    # lane-dense adjacency vregs; left as-is for these tiny demo shapes.

    f32 = jnp.float32
    x_p = _pad_to(x_all.astype(f32), (G, Np, Dp))
    a_p = _pad_to(a_all.astype(f32), (G, Np, Np)).astype(mxu_dtype)
    wl_p = _pad_to(params["wl"].astype(f32), (G, L, Hp, Hp)).astype(mxu_dtype)
    # Pack per-layer vectors (GCN bias, LN gamma, LN beta) into one f32 input.
    lp = jnp.stack([params["bl"], params["gamma"], params["beta"]], axis=2)
    lp_p = _pad_to(lp.astype(f32), (G, L, 3, Hp))
    # Pack shared attention weight + bias; block 0 reused by every grid step.
    ap = jnp.zeros((1, 2, Hp), f32)
    ap = ap.at[0, 0, :H].set(params["wa"].astype(f32))
    ap = ap.at[0, 1, 0].set(jnp.asarray(params["ba"], f32))

    args = [x_p, a_p]
    in_specs = [
        pl.BlockSpec((1, Np, Dp), lambda g, l: (g, 0, 0)),      # node features
        pl.BlockSpec((1, Np, Np), lambda g, l: (g, 0, 0)),      # normalized A_hat
    ]
    if dim_reduction:
        wr_p = _pad_to(params["wr"].astype(f32), (G, Dp, Hp)).astype(mxu_dtype)
        br_p = _pad_to(params["br"].astype(f32).reshape(G, 1, H), (G, 1, Hp))
        args += [wr_p, br_p]
        in_specs += [
            pl.BlockSpec((1, Dp, Hp), lambda g, l: (g, 0, 0)),  # reduce W
            pl.BlockSpec((1, 1, Hp), lambda g, l: (g, 0, 0)),   # reduce b
        ]
    args += [wl_p, lp_p, ap]
    in_specs += [
        pl.BlockSpec((1, 1, Hp, Hp), lambda g, l: (g, l, 0, 0)),  # one layer's W
        pl.BlockSpec((1, 1, 3, Hp), lambda g, l: (g, l, 0, 0)),   # b/gamma/beta
        pl.BlockSpec((1, 2, Hp), lambda g, l: (0, 0, 0)),         # shared attn W/b
    ]

    mxu_bytes = jnp.dtype(mxu_dtype).itemsize
    # Per-step VMEM footprint (single copy); double-buffering handled by the 4x.
    block_bytes = (4 * (Np * Dp + 3 * Hp + 2 * Hp + Hp + Np * Hp)
                   + mxu_bytes * (Np * Np + Hp * Hp)
                   + (mxu_bytes * Dp * Hp + 4 * Hp if dim_reduction else 0))

    # Generation-aware VMEM cap: physical capacity minus headroom (never ask for
    # all of v7x's 64 MiB; allow >64 MiB blocks on v5e/v6e's 128 MiB).
    try:
        vmem_cap = int(pltpu.get_tpu_info().vmem_capacity_bytes)
    except Exception:
        vmem_cap = 64 * 1024 * 1024
    headroom = 16 * 1024 * 1024
    vmem_limit = int(min(max(vmem_cap - headroom, 16 * 1024 * 1024),
                         max(32 * 1024 * 1024, 4 * block_bytes)))

    flops_per_graph = (
        (2 * Np * Dp * Hp if dim_reduction else 0)
        + L * (2 * Np * Hp * Hp + 2 * Np * Np * Hp + 10 * Np * Hp)
        + 5 * Np * Hp)
    bytes_accessed = (sum(int(t.size) * t.dtype.itemsize for t in args)
                      + G * Hp * 4)

    kern = functools.partial(_graph_layer_kernel, num_layers=L,
                             dim_reduction=dim_reduction,
                             num_nodes=N, h_dim=H)
    graph_reps = pl.pallas_call(
        kern,
        out_shape=jax.ShapeDtypeStruct((1, G * Hp), f32),
        grid=(G, L),
        in_specs=in_specs,
        out_specs=pl.BlockSpec((1, Hp), lambda g, l: (0, g)),   # lane-dense writes
        scratch_shapes=[pltpu.VMEM((Np, Hp), f32)],             # x carry across layers
        compiler_params=pltpu.CompilerParams(
            dimension_semantics=("parallel", "arbitrary"),      # megacore on graphs
            vmem_limit_bytes=vmem_limit),
        cost_estimate=pl.CostEstimate(
            flops=int(G * flops_per_graph),
            transcendentals=int(G * (L * Np + 2 * Np)),
            bytes_accessed=int(bytes_accessed)),
    )(*args)

    # torch.cat(all_graph_features, dim=0) -> (G*H,), then the classifier head.
    combined = graph_reps.reshape(G, Hp)[:, :H].reshape(1, G * H)
    # TODO(synk): reference module uses an undefined `self.classifier`; realized
    # as Linear(num_graphs * h_dim, num_classes) in plain XLA (the (1,G*H)x(G*H,C)
    # matmul is far below one MXU pass; a second pallas_call would cost more).
    logits = combined @ params["wc"].astype(f32) + params["bc"].astype(f32)[None, :]
    return logits[0]


def reference_forward(x_all, a_all, params, *, num_layers, dim_reduction,
                      mxu_dtype=jnp.float32):
    """Pure-JAX reference (mirrors the PyTorch module; optionally mirrors the
    kernel's bf16 MXU-operand casting for tight bf16 comparison)."""
    f32 = jnp.float32
    G = x_all.shape[0]
    reps = []
    for g in range(G):
        x = x_all[g].astype(f32)
        a = a_all[g].astype(mxu_dtype)
        if dim_reduction:
            w = params["wr"][g].astype(mxu_dtype)
            x = jnp.dot(x.astype(mxu_dtype), w,
                        preferred_element_type=f32) + params["br"][g]
        for l in range(num_layers):
            w = params["wl"][g, l].astype(mxu_dtype)
            h1 = jnp.dot(x.astype(mxu_dtype), w, preferred_element_type=f32)
            conv = jnp.dot(a, h1.astype(mxu_dtype),
                           preferred_element_type=f32) + params["bl"][g, l]
            mu = conv.mean(-1, keepdims=True)
            var = ((conv - mu) ** 2).mean(-1, keepdims=True)
            conv = (conv - mu) / jnp.sqrt(var + 1e-5)
            conv = conv * params["gamma"][g, l] + params["beta"][g, l]
            conv = jnp.maximum(conv, 0.0)
            x = x + conv
        scores = x @ params["wa"][:, None] + params["ba"]
        attn = jax.nn.softmax(scores, axis=0)
        reps.append((attn * x).sum(0))
    combined = jnp.concatenate(reps)[None, :]
    return (combined @ params["wc"] + params["bc"])[0]


def make_params(key, G, Din, H, L, C, dim_reduction):
    h = H if dim_reduction else Din
    ks = jax.random.split(key, 10)
    nrm = jax.random.normal
    p = {
        "wl": 0.1 * nrm(ks[2], (G, L, h, h), jnp.float32),
        "bl": 0.1 * nrm(ks[3], (G, L, h), jnp.float32),
        "gamma": 1.0 + 0.1 * nrm(ks[4], (G, L, h), jnp.float32),
        "beta": 0.1 * nrm(ks[5], (G, L, h), jnp.float32),
        "wa": 0.1 * nrm(ks[6], (h,), jnp.float32),        # attention_fc is shared
        "ba": 0.1 * nrm(ks[7], (), jnp.float32),
        "wc": 0.1 * nrm(ks[8], (G * h, C), jnp.float32),
        "bc": 0.1 * nrm(ks[9], (C,), jnp.float32),
    }
    if dim_reduction:
        p["wr"] = 0.1 * nrm(ks[0], (G, Din, H), jnp.float32)
        p["br"] = 0.1 * nrm(ks[1], (G, H), jnp.float32)
    return p


# ---------------------------------------------------------------------------
# Main
# ---------------------------------------------------------------------------
if __name__ == "__main__":
    G, N, DIN, H, L, C = 2, 16, 16, 32, 2, 3

    key = jax.random.PRNGKey(0)
    kx, kp_true, kp_false = jax.random.split(key, 3)

    x_all = jax.random.normal(kx, (G, N, DIN), jnp.float32)

    # Deterministic ring graphs with different strides -> dense normalized A_hat.
    idx = jnp.arange(N)
    a_list = []
    for g in range(G):
        stride = g + 1
        src = jnp.concatenate([idx, (idx + stride) % N])
        dst = jnp.concatenate([(idx + stride) % N, idx])
        a_list.append(build_gcn_adj(jnp.stack([src, dst]), N))
    a_all = jnp.stack(a_list)

    for dim_reduction, kp in ((True, kp_true), (False, kp_false)):
        params = make_params(kp, G, DIN, H, L, C, dim_reduction)
        for mxu_dtype, tol in ((jnp.float32, 2e-3), (jnp.bfloat16, 2e-3)):
            logits = multi_graph_forward(x_all, a_all, params,
                                         num_layers=L,
                                         dim_reduction=dim_reduction,
                                         mxu_dtype=mxu_dtype)
            logits = jax.block_until_ready(logits)
            ref = reference_forward(x_all, a_all, params,
                                    num_layers=L,
                                    dim_reduction=dim_reduction,
                                    mxu_dtype=mxu_dtype)
            assert logits.shape == (C,)
            assert jnp.allclose(logits, ref, rtol=tol, atol=tol), (
                dim_reduction, str(mxu_dtype), logits, ref)

    print("KERNEL_OK")
</pallas_src>

<mosaic_0001>
module attributes {stable_mosaic.version = 11 : i64} {
  func.func @_graph_layer_kernel(%arg0: i32, %arg1: i32, %arg2: memref<1x16x128xf32, #tpu.memory_space<vmem>>, %arg3: memref<1x16x16xf32, #tpu.memory_space<vmem>>, %arg4: memref<1x128x128xf32, #tpu.memory_space<vmem>>, %arg5: memref<1x1x128xf32, #tpu.memory_space<vmem>>, %arg6: memref<1x1x128x128xf32, #tpu.memory_space<vmem>>, %arg7: memref<1x1x3x128xf32, #tpu.memory_space<vmem>>, %arg8: memref<1x2x128xf32, #tpu.memory_space<vmem>>, %arg9: memref<1x128xf32, #tpu.memory_space<vmem>>, %arg10: memref<16x128xf32, #tpu.memory_space<vmem>>) attributes {dimension_semantics = [#tpu.dimension_semantics<parallel>, #tpu.dimension_semantics<arbitrary>], iteration_bounds = array<i64: 2, 2>, scalar_prefetch = 0 : i64, scratch_operands = 1 : i64, tpu.core_type = #tpu.core_type<tc>, window_params = [{transform_indices = @transform_0, window_bounds = array<i64: 1, 16, 128>}, {transform_indices = @transform_1, window_bounds = array<i64: 1, 16, 16>}, {transform_indices = @transform_2, window_bounds = array<i64: 1, 128, 128>}, {transform_indices = @transform_3, window_bounds = array<i64: 1, 1, 128>}, {transform_indices = @transform_4, window_bounds = array<i64: 1, 1, 128, 128>}, {transform_indices = @transform_5, window_bounds = array<i64: 1, 1, 3, 128>}, {pipeline_mode = #tpu.pipeline_mode<synchronous>, transform_indices = @transform_6, window_bounds = array<i64: 1, 2, 128>}, {transform_indices = @transform_7, window_bounds = array<i64: 1, 128>}]} {
    %c0_i32 = arith.constant 0 : i32
    %0 = arith.cmpi eq, %arg1, %c0_i32 : i32
    %1 = arith.extui %0 : i1 to i32
    %c0_i32_0 = arith.constant 0 : i32
    %2 = arith.cmpi ne, %1, %c0_i32_0 : i32
    scf.if %2 {
      %c0_30 = arith.constant 0 : index
      %c0_31 = arith.constant 0 : index
      %c0_32 = arith.constant 0 : index
      %52 = vector.load %arg2[%c0_30, %c0_31, %c0_32] : memref<1x16x128xf32, #tpu.memory_space<vmem>>, vector<1x16x128xf32>
      %53 = vector.shape_cast %52 : vector<1x16x128xf32> to vector<16x128xf32>
      %c0_33 = arith.constant 0 : index
      %c0_34 = arith.constant 0 : index
      %c0_35 = arith.constant 0 : index
      %54 = vector.load %arg4[%c0_33, %c0_34, %c0_35] : memref<1x128x128xf32, #tpu.memory_space<vmem>>, vector<1x128x128xf32>
      %55 = vector.shape_cast %54 : vector<1x128x128xf32> to vector<128x128xf32>
      %cst_36 = arith.constant dense<0.000000e+00> : vector<16x128xf32>
      %56 = tpu.matmul %53, %55, %cst_36 {dimension_numbers = #tpu.dot_dimension_numbers<[1], [0], [0], [1], [0, 0, 1, 1], [], []>} : vector<16x128xf32>, vector<128x128xf32>, vector<16x128xf32> -> vector<16x128xf32>
      %c0_37 = arith.constant 0 : index
      %c0_38 = arith.constant 0 : index
      %c0_39 = arith.constant 0 : index
      %57 = vector.load %arg5[%c0_37, %c0_38, %c0_39] : memref<1x1x128xf32, #tpu.memory_space<vmem>>, vector<1x1x128xf32>
      %58 = vector.shape_cast %57 : vector<1x1x128xf32> to vector<1x128xf32>
      %59 = vector.broadcast %58 : vector<1x128xf32> to vector<16x128xf32>
      %60 = arith.addf %56, %59 : vector<16x128xf32>
      %c0_40 = arith.constant 0 : index
      %c0_41 = arith.constant 0 : index
      %61 = vector.load %arg10[%c0_40, %c0_41] : memref<16x128xf32, #tpu.memory_space<vmem>>, vector<16x128xf32>
      tpu.vector_store %arg10[%c0_40, %c0_41], %60 {strides = array<i32>} : memref<16x128xf32, #tpu.memory_space<vmem>>, vector<16x128xf32>,
    } else {
    }
    %c0 = arith.constant 0 : index
    %c0_1 = arith.constant 0 : index
    %3 = vector.load %arg10[%c0, %c0_1] : memref<16x128xf32, #tpu.memory_space<vmem>>, vector<16x128xf32>
    %c0_2 = arith.constant 0 : index
    %c0_3 = arith.constant 0 : index
    %c0_4 = arith.constant 0 : index
    %4 = vector.load %arg3[%c0_2, %c0_3, %c0_4] : memref<1x16x16xf32, #tpu.memory_space<vmem>>, vector<1x16x16xf32>
    %5 = vector.shape_cast %4 : vector<1x16x16xf32> to vector<16x16xf32>
    %c0_5 = arith.constant 0 : index
    %c0_6 = arith.constant 0 : index
    %c0_7 = arith.constant 0 : index
    %c0_8 = arith.constant 0 : index
    %6 = vector.load %arg6[%c0_5, %c0_6, %c0_7, %c0_8] : memref<1x1x128x128xf32, #tpu.memory_space<vmem>>, vector<1x1x128x128xf32>
    %7 = vector.shape_cast %6 : vector<1x1x128x128xf32> to vector<128x128xf32>
    %c0_9 = arith.constant 0 : index
    %c0_10 = arith.constant 0 : index
    %c0_11 = arith.constant 0 : index
    %c0_12 = arith.constant 0 : index
    %8 = vector.load %arg7[%c0_9, %c0_10, %c0_11, %c0_12] : memref<1x1x3x128xf32, #tpu.memory_space<vmem>>, vector<1x1x1x128xf32>
    %9 = vector.shape_cast %8 : vector<1x1x1x128xf32> to vector<128xf32>
    %c0_13 = arith.constant 0 : index
    %c0_14 = arith.constant 0 : index
    %c1 = arith.constant 1 : index
    %c0_15 = arith.constant 0 : index
    %10 = vector.load %arg7[%c0_13, %c0_14, %c1, %c0_15] : memref<1x1x3x128xf32, #tpu.memory_space<vmem>>, vector<1x1x1x128xf32>
    %11 = vector.shape_cast %10 : vector<1x1x1x128xf32> to vector<128xf32>
    %c0_16 = arith.constant 0 : index
    %c0_17 = arith.constant 0 : index
    %c2 = arith.constant 2 : index
    %c0_18 = arith.constant 0 : index
    %12 = vector.load %arg7[%c0_16, %c0_17, %c2, %c0_18] : memref<1x1x3x128xf32, #tpu.memory_space<vmem>>, vector<1x1x1x128xf32>
    %13 = vector.shape_cast %12 : vector<1x1x1x128xf32> to vector<128xf32>
    %cst = arith.constant dense<0.000000e+00> : vector<16x128xf32>
    %14 = tpu.matmul %3, %7, %cst {dimension_numbers = #tpu.dot_dimension_numbers<[1], [0], [0], [1], [0, 0, 1, 1], [], []>} : vector<16x128xf32>, vector<128x128xf32>, vector<16x128xf32> -> vector<16x128xf32>
    %cst_19 = arith.constant dense<0.000000e+00> : vector<16x128xf32>
    %15 = tpu.matmul %5, %14, %cst_19 {dimension_numbers = #tpu.dot_dimension_numbers<[1], [0], [0], [1], [0, 0, 1, 1], [], []>} : vector<16x16xf32>, vector<16x128xf32>, vector<16x128xf32> -> vector<16x128xf32>
    %16 = vector.shape_cast %9 : vector<128xf32> to vector<1x128xf32>
    %17 = vector.broadcast %16 : vector<1x128xf32> to vector<16x128xf32>
    %18 = arith.addf %15, %17 : vector<16x128xf32>
    %cst_20 = arith.constant dense<0.000000e+00> : vector<16xf32>
    %19 = vector.multi_reduction <add>, %18, %cst_20 [1] : vector<16x128xf32> to vector<16xf32>
    %20 = vector.shape_cast %19 : vector<16xf32> to vector<16x1xf32>
    %cst_21 = arith.constant 3.125000e-02 : f32
    %21 = vector.broadcast %cst_21 : f32 to vector<16x1xf32>
    %22 = arith.mulf %20, %21 : vector<16x1xf32>
    %23 = arith.mulf %18, %18 : vector<16x128xf32>
    %cst_22 = arith.constant dense<0.000000e+00> : vector<16xf32>
    %24 = vector.multi_reduction <add>, %23, %cst_22 [1] : vector<16x128xf32> to vector<16xf32>
    %25 = vector.shape_cast %24 : vector<16xf32> to vector<16x1xf32>
    %cst_23 = arith.constant 3.125000e-02 : f32
    %26 = vector.broadcast %cst_23 : f32 to vector<16x1xf32>
    %27 = arith.mulf %25, %26 : vector<16x1xf32>
    %28 = arith.mulf %22, %22 : vector<16x1xf32>
    %29 = arith.subf %27, %28 : vector<16x1xf32>
    %cst_24 = arith.constant 0.000000e+00 : f32
    %30 = vector.broadcast %cst_24 : f32 to vector<16x1xf32>
    %31 = arith.maximumf %29, %30 : vector<16x1xf32>
    %32 = vector.broadcast %22 : vector<16x1xf32> to vector<16x128xf32>
    %33 = arith.subf %18, %32 : vector<16x128xf32>
    %cst_25 = arith.constant 9.99999974E-6 : f32
    %34 = vector.broadcast %cst_25 : f32 to vector<16x1xf32>
    %35 = arith.addf %31, %34 : vector<16x1xf32>
    %36 = math.rsqrt %35 : vector<16x1xf32>
    %37 = vector.broadcast %36 : vector<16x1xf32> to vector<16x128xf32>
    %38 = arith.mulf %33, %37 : vector<16x128xf32>
    %39 = vector.shape_cast %11 : vector<128xf32> to vector<1x128xf32>
    %40 = vector.broadcast %39 : vector<1x128xf32> to vector<16x128xf32>
    %41 = arith.mulf %38, %40 : vector<16x128xf32>
    %42 = vector.shape_cast %13 : vector<128xf32> to vector<1x128xf32>
    %43 = vector.broadcast %42 : vector<1x128xf32> to vector<16x128xf32>
    %44 = arith.addf %41, %43 : vector<16x128xf32>
    %cst_26 = arith.constant 0.000000e+00 : f32
    %45 = vector.broadcast %cst_26 : f32 to vector<16x128xf32>
    %46 = arith.maximumf %44, %45 : vector<16x128xf32>
    %47 = arith.addf %3, %46 : vector<16x128xf32>
    %c0_27 = arith.constant 0 : index
    %c0_28 = arith.constant 0 : index
    %48 = vector.load %arg10[%c0_27, %c0_28] : memref<16x128xf32, #tpu.memory_space<vmem>>, vector<16x128xf32>
    tpu.vector_store %arg10[%c0_27, %c0_28], %47 {strides = array<i32>} : memref<16x128xf32, #tpu.memory_space<vmem>>, vector<16x128xf32>,
    %c1_i32 = arith.constant 1 : i32
    %49 = arith.cmpi eq, %arg1, %c1_i32 : i32
    %50 = arith.extui %49 : i1 to i32
    %c0_i32_29 = arith.constant 0 : i32
    %51 = arith.cmpi ne, %50, %c0_i32_29 : i32
    scf.if %51 {
      %c0_30 = arith.constant 0 : index
      %c0_31 = arith.constant 0 : index
      %52 = vector.load %arg10[%c0_30, %c0_31] : memref<16x128xf32, #tpu.memory_space<vmem>>, vector<16x128xf32>
      %c0_32 = arith.constant 0 : index
      %c0_33 = arith.constant 0 : index
      %c0_34 = arith.constant 0 : index
      %53 = vector.load %arg8[%c0_32, %c0_33, %c0_34] : memref<1x2x128xf32, #tpu.memory_space<vmem>>, vector<1x2x128xf32>
      %54 = vector.shape_cast %53 : vector<1x2x128xf32> to vector<2x128xf32>
      %55 = vector.extract_strided_slice %54 {offsets = [0, 0], sizes = [1, 128], strides = [1, 1]} : vector<2x128xf32> to vector<1x128xf32>
      %56 = vector.extract_strided_slice %54 {offsets = [1, 0], sizes = [1, 1], strides = [1, 1]} : vector<2x128xf32> to vector<1x1xf32>
      %57 = vector.broadcast %55 : vector<1x128xf32> to vector<16x128xf32>
      %58 = arith.mulf %52, %57 : vector<16x128xf32>
      %cst_35 = arith.constant dense<0.000000e+00> : vector<16xf32>
      %59 = vector.multi_reduction <add>, %58, %cst_35 [1] : vector<16x128xf32> to vector<16xf32>
      %60 = vector.shape_cast %59 : vector<16xf32> to vector<16x1xf32>
      %61 = vector.broadcast %56 : vector<1x1xf32> to vector<16x1xf32>
      %62 = arith.addf %60, %61 : vector<16x1xf32>
      %63 = tpu.iota {dimensions = array<i32: 0>} : vector<16x1xi32>
      %c16_i32 = arith.constant 16 : i32
      %64 = vector.broadcast %c16_i32 : i32 to vector<16x1xi32>
      %65 = arith.cmpi slt, %63, %64 : vector<16x1xi32>
      %cst_36 = arith.constant -1.000000e+30 : f32
      %66 = vector.broadcast %cst_36 : f32 to vector<16x1xf32>
      %67 = arith.select %65, %62, %66 : vector<16x1xi1>, vector<16x1xf32>
      %cst_37 = arith.constant dense<0xFF800000> : vector<1xf32>
      %68 = vector.multi_reduction <maximumf>, %67, %cst_37 [0] : vector<16x1xf32> to vector<1xf32>
      %69 = vector.shape_cast %68 : vector<1xf32> to vector<1x1xf32>
      %70 = vector.broadcast %69 : vector<1x1xf32> to vector<16x1xf32>
      %71 = arith.subf %67, %70 : vector<16x1xf32>
      %72 = math.exp %71 : vector<16x1xf32>
      %cst_38 = arith.constant dense<0.000000e+00> : vector<1xf32>
      %73 = vector.multi_reduction <add>, %72, %cst_38 [0] : vector<16x1xf32> to vector<1xf32>
      %74 = vector.shape_cast %73 : vector<1xf32> to vector<1x1xf32>
      %75 = tpu.reciprocal %74 {approx = true} : vector<1x1xf32> -> vector<1x1xf32>
      %76 = arith.mulf %74, %75 : vector<1x1xf32>
      %cst_39 = arith.constant 2.000000e+00 : f32
      %77 = vector.broadcast %cst_39 : f32 to vector<1x1xf32>
      %78 = arith.subf %77, %76 : vector<1x1xf32>
      %79 = arith.mulf %75, %78 : vector<1x1xf32>
      %80 = vector.broadcast %79 : vector<1x1xf32> to vector<16x1xf32>
      %81 = arith.mulf %72, %80 : vector<16x1xf32>
      %82 = vector.broadcast %81 : vector<16x1xf32> to vector<16x128xf32>
      %83 = arith.mulf %82, %52 : vector<16x128xf32>
      %cst_40 = arith.constant dense<0.000000e+00> : vector<128xf32>
      %84 = vector.multi_reduction <add>, %83, %cst_40 [0] : vector<16x128xf32> to vector<128xf32>
      %85 = vector.shape_cast %84 : vector<128xf32> to vector<1x128xf32>
      %c0_41 = arith.constant 0 : index
      %c0_42 = arith.constant 0 : index
      %86 = vector.load %arg9[%c0_41, %c0_42] : memref<1x128xf32, #tpu.memory_space<vmem>>, vector<1x128xf32>
      tpu.vector_store %arg9[%c0_41, %c0_42], %85 {strides = array<i32>} : memref<1x128xf32, #tpu.memory_space<vmem>>, vector<1x128xf32>,
    } else {
    }
    return
  }
  func.func @transform_0(%arg0: i32, %arg1: i32) -> (i32, i32, i32) {
    %c0_i32 = arith.constant 0 : i32
    %c0_i32_0 = arith.constant 0 : i32
    %c0_i32_1 = arith.constant 0 : i32
    return %arg0, %c0_i32, %c0_i32_0 : i32, i32, i32
  }
  func.func @transform_1(%arg0: i32, %arg1: i32) -> (i32, i32, i32) {
    %c0_i32 = arith.constant 0 : i32
    %c0_i32_0 = arith.constant 0 : i32
    %c0_i32_1 = arith.constant 0 : i32
    return %arg0, %c0_i32, %c0_i32_0 : i32, i32, i32
  }
  func.func @transform_2(%arg0: i32, %arg1: i32) -> (i32, i32, i32) {
    %c0_i32 = arith.constant 0 : i32
    %c0_i32_0 = arith.constant 0 : i32
    %c0_i32_1 = arith.constant 0 : i32
    return %arg0, %c0_i32, %c0_i32_0 : i32, i32, i32
  }
  func.func @transform_3(%arg0: i32, %arg1: i32) -> (i32, i32, i32) {
    %c0_i32 = arith.constant 0 : i32
    %c0_i32_0 = arith.constant 0 : i32
    %c0_i32_1 = arith.constant 0 : i32
    return %arg0, %c0_i32, %c0_i32_0 : i32, i32, i32
  }
  func.func @transform_4(%arg0: i32, %arg1: i32) -> (i32, i32, i32, i32) {
    %c0_i32 = arith.constant 0 : i32
    %c0_i32_0 = arith.constant 0 : i32
    %c0_i32_1 = arith.constant 0 : i32
    return %arg0, %arg1, %c0_i32, %c0_i32_0 : i32, i32, i32, i32
  }
  func.func @transform_5(%arg0: i32, %arg1: i32) -> (i32, i32, i32, i32) {
    %c0_i32 = arith.constant 0 : i32
    %c0_i32_0 = arith.constant 0 : i32
    %c0_i32_1 = arith.constant 0 : i32
    return %arg0, %arg1, %c0_i32, %c0_i32_0 : i32, i32, i32, i32
  }
  func.func @transform_6(%arg0: i32, %arg1: i32) -> (i32, i32, i32) {
    %c0_i32 = arith.constant 0 : i32
    %c0_i32_0 = arith.constant 0 : i32
    %c0_i32_1 = arith.constant 0 : i32
    %c0_i32_2 = arith.constant 0 : i32
    return %c0_i32, %c0_i32_0, %c0_i32_1 : i32, i32, i32
  }
  func.func @transform_7(%arg0: i32, %arg1: i32) -> (i32, i32) {
    %c0_i32 = arith.constant 0 : i32
    %c0_i32_0 = arith.constant 0 : i32
    return %c0_i32, %arg0 : i32, i32
  }
}

</mosaic_0001>

<llo_original>
// kernel: tpu_custom_call.1
$region0: #{tpu_custom_call.1}
  #allocation0 [shape = 'u32[]', space=smem, size = 0x4, offset = 0x4, fixed_abs, tag = 'smem constant byte address 0x4 - core index']
  #allocation1 [shape = 'u32[144,128]{1,0:T(1,128)}', space=vmem, size = 0x12000, scoped, tag = 'internal scratch']
  #allocation2 [shape = 'f32[16,128]{1,0:T(8,128)}', space=vmem, size = 0x2000, scoped, tag = 'scratch operand']
  %s0 = inlined_call_operand.hbm [shape: f32[2,16,128], index: 0, kind: input, shape index: {}]
  %s1 = inlined_call_operand.hbm [shape: f32[2,16,16], index: 1, kind: input, shape index: {}]
  %s2 = inlined_call_operand.hbm [shape: f32[2,128,128], index: 2, kind: input, shape index: {}]
  %s3 = inlined_call_operand.vmem [shape: f32[2,1,128], index: 3, kind: input, shape index: {}]
  %s4 = inlined_call_operand.hbm [shape: f32[2,2,128,128], index: 4, kind: input, shape index: {}]
  %s5 = inlined_call_operand.vmem [shape: f32[2,2,3,128], index: 5, kind: input, shape index: {}]
  %s6 = inlined_call_operand.vmem [shape: f32[1,2,128], index: 6, kind: input, shape index: {}]
  %s7 = inlined_call_operand.hbm [shape: f32[1,256], index: 7, kind: output, shape index: {}]
  %s8 = sld [smem:[#allocation0]]
  $region85: #{tpu_custom_call.1} parent=0
    _
  %s10 = ssub.s32 1, %s8
  %s11 = scalar_select 0, %s10, %s8
  $region1: #{tpu_custom_call.1} parent=0
    #allocation3 [shape = 'u8[16384]{0}', space=vmem, size = 0x4000, scoped, tag = 'input window, operand 0']
    #allocation4 [shape = 's32[2]{0}', space=sflag, size = 0x8, scoped, tag = 'scoped memory for tpu_custom_call.1']
    #allocation5 [shape = 's32[2]{0}', space=sflag, size = 0x8, scoped, tag = 'scoped memory for tpu_custom_call.1']
    #allocation6 [shape = 'u8[16384]{0}', space=vmem, size = 0x4000, scoped, tag = 'input window, operand 1']
    #allocation7 [shape = 's32[2]{0}', space=sflag, size = 0x8, scoped, tag = 'scoped memory for tpu_custom_call.1']
    #allocation8 [shape = 'u8[131072]{0}', space=vmem, size = 0x20000, scoped, tag = 'input window, operand 2']
    #allocation9 [shape = 'u8[131072]{0}', space=vmem, size = 0x20000, scoped, tag = 'input window, operand 4']
    #allocation10 [shape = 's32[2]{0}', space=sflag, size = 0x8, scoped, tag = 'scoped memory for tpu_custom_call.1']
    #allocation11 [shape = 'u8[1024]{0}', space=vmem, size = 0x400, scoped, tag = 'output window, operand 0']
    %12 = vsyncpa [#allocation4], 0
    %s13 = scalar_lea.sflag [#allocation4], 1
    %14 = vsyncpa %s13, 0
    %15 = vsyncpa [#allocation7], 0
    %s16 = scalar_lea.sflag [#allocation7], 1
    %17 = vsyncpa %s16, 0
    %18 = vsyncpa [#allocation10], 0
    %s19 = scalar_lea.sflag [#allocation10], 1
    %20 = vsyncpa %s19, 0
    %21 = vsyncpa [#allocation5], 0
    %s22 = scalar_lea.sflag [#allocation5], 1
    %23 = vsyncpa %s22, 0
    loop: start=0, step=1, limit=6
    $region2: #{tpu_custom_call.1} parent=1 // loop_pre_header
      _
    $region3: #{tpu_custom_call.1} parent=1 // loop_header
      %s25 = sphi 0, %s29
      %p26 = scmp.ge.s32.totalorder %s25, 6
      %s32 = sphi 0, %s44
      %s33 = sphi 0, %s40
      %s34 = sphi 0, %s32
      %s35 = sphi 0, %s33
      %s36 = sphi 0, %s34
      %s37 = sphi 0, %s35
      %s47 = sphi 0, %s49
      %s50 = sphi 0, %s47
      %s51 = sphi 0, %s50
      %s67 = sphi 0, %s51
      %s73 = sphi 0, %s75
      %s76 = sphi 0, %s73
      %s77 = sphi 0, %s76
      %s93 = sphi 0, %s77
      %s99 = sphi 0, %s101
      %s102 = sphi 0, %s99
      %s103 = sphi 0, %s102
      %s119 = sphi 0, %s103
      %s125 = sphi 0, %s127
      %s128 = sphi 0, %s125
      %s129 = sphi 0, %s128
      %s145 = sphi 0, %s129
      %s153 = sphi 0, %s155
      %s156 = sphi 0, %s153
      %s157 = sphi 0, %s156
      %s173 = sphi 0, %s157
      %s181 = sphi 0, %s183
      %s184 = sphi 0, %s181
      %s185 = sphi 0, %s184
      %s201 = sphi 0, %s185
      %s205 = sphi 0, %s205
      %s207 = sphi 0, %s205
      %s208 = sphi 0, %s207
      %s222 = sphi 0, %s208
      %s228 = sphi 0, %s230
      %s231 = sphi 0, %s228
      %s232 = sphi 0, %s231
      %s248 = sphi 0, %s232
    $region4: #{tpu_custom_call.1} parent=1 // loop_header_branch
      %28 = sbr.rel (%p26) target = $region8
    $region5: #{tpu_custom_call.1} parent=1 // loop_body
      %s30 = ssub.s32 %s25, 1
      %s31 = ssub.s32 %s25, 2
      %s38 = sadd.s32 1, %s33
      %p39 = scmp.ge.s32.totalorder %s38, 2
      %s40 = scalar_select %p39, 0, %s38
      %s41 = sadd.s32 1, %s32
      %s42 = scalar_select %p39, %s41, %s32
      %p43 = scmp.ge.s32.totalorder %s42, 2
      %s44 = scalar_select %p43, 0, %s42
      %s45 = ssub.s32 %s32, %s44
      %p46 = scmp.eq.s32.totalorder %s45, 0
      %s48 = sadd.s32 %s47, 1
      %s49 = scalar_select %p46, %s47, %s48
      %p52 = pneg %p46
      %p53 = scmp.eq.s32.totalorder %s25, 3
      %p54 = por %p52, %p53
      %p55 = scmp.ne.s32.totalorder %s47, %s50
      %p56 = scmp.eq.s32.totalorder %s25, 0
      %p57 = por %p55, %p56
      %p58 = scmp.ne.s32.totalorder %s47, %s50
      %p59 = scmp.eq.s32.totalorder %s30, 3
      %p60 = por %p58, %p59
      %p61 = scmp.ne.s32.totalorder %s50, %s51
      %p62 = scmp.eq.s32.totalorder %s30, 0
      %p63 = por %p61, %p62
      %p64 = scmp.ne.s32.totalorder %s50, %s51
      %p65 = scmp.eq.s32.totalorder %s31, 3
      %p66 = por %p64, %p65
      %p68 = scmp.ne.s32.totalorder %s51, %s67
      %p69 = scmp.eq.s32.totalorder %s31, 0
      %p70 = por %p68, %p69
      %s71 = ssub.s32 %s32, %s44
      %p72 = scmp.eq.s32.totalorder %s71, 0
      %s74 = sadd.s32 %s73, 1
      %s75 = scalar_select %p72, %s73, %s74
      %p78 = pneg %p72
      %p79 = scmp.eq.s32.totalorder %s25, 3
      %p80 = por %p78, %p79
      %p81 = scmp.ne.s32.totalorder %s73, %s76
      %p82 = scmp.eq.s32.totalorder %s25, 0
      %p83 = por %p81, %p82
      %p84 = scmp.ne.s32.totalorder %s73, %s76
      %p85 = scmp.eq.s32.totalorder %s30, 3
      %p86 = por %p84, %p85
      %p87 = scmp.ne.s32.totalorder %s76, %s77
      %p88 = scmp.eq.s32.totalorder %s30, 0
      %p89 = por %p87, %p88
      %p90 = scmp.ne.s32.totalorder %s76, %s77
      %p91 = scmp.eq.s32.totalorder %s31, 3
      %p92 = por %p90, %p91
      %p94 = scmp.ne.s32.totalorder %s77, %s93
      %p95 = scmp.eq.s32.totalorder %s31, 0
      %p96 = por %p94, %p95
      %s97 = ssub.s32 %s32, %s44
      %p98 = scmp.eq.s32.totalorder %s97, 0
      %s100 = sadd.s32 %s99, 1
      %s101 = scalar_select %p98, %s99, %s100
      %p104 = pneg %p98
      %p105 = scmp.eq.s32.totalorder %s25, 3
      %p106 = por %p104, %p105
      %p107 = scmp.ne.s32.totalorder %s99, %s102
      %p108 = scmp.eq.s32.totalorder %s25, 0
      %p109 = por %p107, %p108
      %p110 = scmp.ne.s32.totalorder %s99, %s102
      %p111 = scmp.eq.s32.totalorder %s30, 3
      %p112 = por %p110, %p111
      %p113 = scmp.ne.s32.totalorder %s102, %s103
      %p114 = scmp.eq.s32.totalorder %s30, 0
      %p115 = por %p113, %p114
      %p116 = scmp.ne.s32.totalorder %s102, %s103
      %p117 = scmp.eq.s32.totalorder %s31, 3
      %p118 = por %p116, %p117
      %p120 = scmp.ne.s32.totalorder %s103, %s119
      %p121 = scmp.eq.s32.totalorder %s31, 0
      %p122 = por %p120, %p121
      %s123 = ssub.s32 %s32, %s44
      %p124 = scmp.eq.s32.totalorder %s123, 0
      %s126 = sadd.s32 %s125, 1
      %s127 = scalar_select %p124, %s125, %s126
      %p130 = pneg %p124
      %p131 = scmp.eq.s32.totalorder %s25, 3
      %p132 = por %p130, %p131
      %p133 = scmp.ne.s32.totalorder %s125, %s128
      %p134 = scmp.eq.s32.totalorder %s25, 0
      %p135 = por %p133, %p134
      %p136 = scmp.ne.s32.totalorder %s125, %s128
      %p137 = scmp.eq.s32.totalorder %s30, 3
      %p138 = por %p136, %p137
      %p139 = scmp.ne.s32.totalorder %s128, %s129
      %p140 = scmp.eq.s32.totalorder %s30, 0
      %p141 = por %p139, %p140
      %p142 = scmp.ne.s32.totalorder %s128, %s129
      %p143 = scmp.eq.s32.totalorder %s31, 3
      %p144 = por %p142, %p143
      %p146 = scmp.ne.s32.totalorder %s129, %s145
      %p147 = scmp.eq.s32.totalorder %s31, 0
      %p148 = por %p146, %p147
      %s149 = ssub.s32 %s32, %s44
      %s150 = ssub.s32 %s33, %s40
      %s151 = sor.u32 %s149, %s150
      %p152 = scmp.eq.s32.totalorder %s151, 0
      %s154 = sadd.s32 %s153, 1
      %s155 = scalar_select %p152, %s153, %s154
      %p158 = pneg %p152
      %p159 = scmp.eq.s32.totalorder %s25, 3
      %p160 = por %p158, %p159
      %p161 = scmp.ne.s32.totalorder %s153, %s156
      %p162 = scmp.eq.s32.totalorder %s25, 0
      %p163 = por %p161, %p162
      %p164 = scmp.ne.s32.totalorder %s153, %s156
      %p165 = scmp.eq.s32.totalorder %s30, 3
      %p166 = por %p164, %p165
      %p167 = scmp.ne.s32.totalorder %s156, %s157
      %p168 = scmp.eq.s32.totalorder %s30, 0
      %p169 = por %p167, %p168
      %p170 = scmp.ne.s32.totalorder %s156, %s157
      %p171 = scmp.eq.s32.totalorder %s31, 3
      %p172 = por %p170, %p171
      %p174 = scmp.ne.s32.totalorder %s157, %s173
      %p175 = scmp.eq.s32.totalorder %s31, 0
      %p176 = por %p174, %p175
      %s177 = ssub.s32 %s32, %s44
      %s178 = ssub.s32 %s33, %s40
      %s179 = sor.u32 %s177, %s178
      %p180 = scmp.eq.s32.totalorder %s179, 0
      %s182 = sadd.s32 %s181, 1
      %s183 = scalar_select %p180, %s181, %s182
      %p186 = pneg %p180
      %p187 = scmp.eq.s32.totalorder %s25, 3
      %p188 = por %p186, %p187
      %p189 = scmp.ne.s32.totalorder %s181, %s184
      %p190 = scmp.eq.s32.totalorder %s25, 0
      %p191 = por %p189, %p190
      %p192 = scmp.ne.s32.totalorder %s181, %s184
      %p193 = scmp.eq.s32.totalorder %s30, 3
      %p194 = por %p192, %p193
      %p195 = scmp.ne.s32.totalorder %s184, %s185
      %p196 = scmp.eq.s32.totalorder %s30, 0
      %p197 = por %p195, %p196
      %p198 = scmp.ne.s32.totalorder %s184, %s185
      %p199 = scmp.eq.s32.totalorder %s31, 3
      %p200 = por %p198, %p199
      %p202 = scmp.ne.s32.totalorder %s185, %s201
      %p203 = scmp.eq.s32.totalorder %s31, 0
      %p204 = por %p202, %p203
      %s206 = sadd.s32 %s205, 1
      %p209 = scmp.eq.s32.totalorder %s25, 3
      %p210 = scmp.ne.s32.totalorder %s205, %s207
      %p211 = scmp.eq.s32.totalorder %s25, 0
      %p212 = por %p210, %p211
      %p213 = scmp.ne.s32.totalorder %s205, %s207
      %p214 = scmp.eq.s32.totalorder %s30, 3
      %p215 = por %p213, %p214
      %p216 = scmp.ne.s32.totalorder %s207, %s208
      %p217 = scmp.eq.s32.totalorder %s30, 0
      %p218 = por %p216, %p217
      %p219 = scmp.ne.s32.totalorder %s207, %s208
      %p220 = scmp.eq.s32.totalorder %s31, 3
      %p221 = por %p219, %p220
      %p223 = scmp.ne.s32.totalorder %s208, %s222
      %p224 = scmp.eq.s32.totalorder %s31, 0
      %p225 = por %p223, %p224
      %s226 = ssub.s32 %s32, %s44
      %p227 = scmp.eq.s32.totalorder %s226, 0
      %s229 = sadd.s32 %s228, 1
      %s230 = scalar_select %p227, %s228, %s229
      %p233 = pneg %p227
      %p234 = scmp.eq.s32.totalorder %s25, 3
      %p235 = por %p233, %p234
      %p236 = scmp.ne.s32.totalorder %s228, %s231
      %p237 = scmp.eq.s32.totalorder %s25, 0
      %p238 = por %p236, %p237
      %p239 = scmp.ne.s32.totalorder %s228, %s231
      %p240 = scmp.eq.s32.totalorder %s30, 3
      %p241 = por %p239, %p240
      %p242 = scmp.ne.s32.totalorder %s231, %s232
      %p243 = scmp.eq.s32.totalorder %s30, 0
      %p244 = por %p242, %p243
      %p245 = scmp.ne.s32.totalorder %s231, %s232
      %p246 = scmp.eq.s32.totalorder %s31, 3
      %p247 = por %p245, %p246
      %p249 = scmp.ne.s32.totalorder %s232, %s248
      %p250 = scmp.eq.s32.totalorder %s31, 0
      %p251 = por %p249, %p250
      %p252 = scmp.le.s32.totalorder 1, %s25
      %p253 = scmp.lt.s32.totalorder %s25, 5
      %p254 = pnand %p252, %p253
      %p255 = pneg %p254
      // Predicated region
      $region9: #{tpu_custom_call.1} parent=5 // pred_check
        _
      $region10: #{tpu_custom_call.1} parent=5 // pred_check_branch
        %257 = sbr.rel (%p254) target = $region12
      $region11: #{tpu_custom_call.1} parent=5 // pred_region
        %s258 = ssub.s32 %s25, 1
        // Predicated region
        $region13: #{tpu_custom_call.1} parent=11 // pred_check
          %p259 = pneg %p218
        $region14: #{tpu_custom_call.1} parent=11 // pred_check_branch
          %261 = sbr.rel (%p259) target = $region16
        $region15: #{tpu_custom_call.1} parent=11 // pred_region
          _
        $region16: #{tpu_custom_call.1} parent=11 // pred_fallthru
          _
      $region12: #{tpu_custom_call.1} parent=5 // pred_fallthru
        _
      %p262 = scmp.lt.s32.totalorder %s25, 4
      // Predicated region
      $region17: #{tpu_custom_call.1} parent=5 // pred_check
        %p263 = pneg %p262
      $region18: #{tpu_custom_call.1} parent=5 // pred_check_branch
        %265 = sbr.rel (%p263) target = $region20
      $region19: #{tpu_custom_call.1} parent=5 // pred_region
        // Predicated region
        $region21: #{tpu_custom_call.1} parent=19 // pred_check
          %p266 = pneg %p57
        $region22: #{tpu_custom_call.1} parent=19 // pred_check_branch
          %268 = sbr.rel (%p266) target = $region24
        $region23: #{tpu_custom_call.1} parent=19 // pred_region
          %s269 = sand.u32 %s47, 1
          %s270 = scalar_lea.sflag [#allocation4], %s269
          %s271 = sand.u32 %s47, 1
          %s272 = smul.addr %s271, 16
          %s273 = scalar_lea.vmem [#allocation3], %s272
          %s275 = ssub.s32 256, 256
          %276 = vsyncadd %s270, %s275
          %s277 = smul.addr %s32, 2
          %s278 = smul.addr %s277, 128
          %s279 = scalar_lea.hbm %s0, %s278
          %s280 = sshll.u32 %s273, 4
          %s281 = int_to_ptr.vmem [resolvable:$true] %s280
          %286 = dma.hbm_to_vmem [thread:$0]  %s279, 256, %s281, %s270, 128, 128, 8
        $region24: #{tpu_custom_call.1} parent=19 // pred_fallthru
          _
        // Predicated region
        $region25: #{tpu_custom_call.1} parent=19 // pred_check
          %p287 = pneg %p83
        $region26: #{tpu_custom_call.1} parent=19 // pred_check_branch
          %289 = sbr.rel (%p287) target = $region28
        $region27: #{tpu_custom_call.1} parent=19 // pred_region
          %s290 = sand.u32 %s25, 1
          %s291 = scalar_lea.sflag [#allocation7], %s290
          %s292 = sand.u32 %s73, 1
          %s293 = smul.addr %s292, 16
          %s294 = scalar_lea.vmem [#allocation6], %s293
          %s296 = ssub.s32 256, 256
          %297 = vsyncadd %s291, %s296
          %s298 = smul.addr %s32, 2
          %s299 = smul.addr %s298, 128
          %s300 = scalar_lea.hbm %s1, %s299
          %s301 = sshll.u32 %s294, 4
          %s302 = int_to_ptr.vmem [resolvable:$true] %s301
          %307 = dma.hbm_to_vmem [thread:$0]  %s300, 256, %s302, %s291, 128, 128, 8
        $region28: #{tpu_custom_call.1} parent=19 // pred_fallthru
          _
        // Predicated region
        $region29: #{tpu_custom_call.1} parent=19 // pred_check
          %p308 = pneg %p109
        $region30: #{tpu_custom_call.1} parent=19 // pred_check_branch
          %310 = sbr.rel (%p308) target = $region32
        $region31: #{tpu_custom_call.1} parent=19 // pred_region
          %s311 = sand.u32 %s25, 1
          %s312 = scalar_lea.sflag [#allocation7], %s311
          %s313 = sand.u32 %s99, 1
          %s314 = smul.addr %s313, 128
          %s315 = scalar_lea.vmem [#allocation8], %s314
          %s317 = ssub.s32 2048, 2048
          %318 = vsyncadd %s312, %s317
          %s319 = smul.addr %s32, 16
          %s320 = smul.addr %s319, 128
          %s321 = scalar_lea.hbm %s2, %s320
          %s322 = sshll.u32 %s315, 4
          %s323 = int_to_ptr.vmem [resolvable:$true] %s322
          %328 = dma.hbm_to_vmem [thread:$0]  %s321, 2048, %s323, %s312, 128, 128, 8
        $region32: #{tpu_custom_call.1} parent=19 // pred_fallthru
          _
        // Predicated region
        $region33: #{tpu_custom_call.1} parent=19 // pred_check
          %p329 = pneg %p135
        $region34: #{tpu_custom_call.1} parent=19 // pred_check_branch
          %331 = sbr.rel (%p329) target = $region36
        $region35: #{tpu_custom_call.1} parent=19 // pred_region
          %p332 = scmp.lt.s32.totalorder %s32, 1
          %s333 = scalar_select %p332, %s32, 1
          %s334 = scalar_lea.vmem %s3, %s333
        $region36: #{tpu_custom_call.1} parent=19 // pred_fallthru
          _
        // Predicated region
        $region37: #{tpu_custom_call.1} parent=19 // pred_check
          %p335 = pneg %p163
        $region38: #{tpu_custom_call.1} parent=19 // pred_check_branch
          %337 = sbr.rel (%p335) target = $region40
        $region39: #{tpu_custom_call.1} parent=19 // pred_region
          %s338 = sand.u32 %s153, 1
          %s339 = scalar_lea.sflag [#allocation10], %s338
          %s340 = sand.u32 %s153, 1
          %s341 = smul.addr %s340, 128
          %s342 = scalar_lea.vmem [#allocation9], %s341
          %s344 = ssub.s32 2048, 2048
          %345 = vsyncadd %s339, %s344
          %s346 = smul.addr %s33, 16
          %s347 = smul.addr %s32, 32
          %s348 = sadd.s32 %s346, %s347
          %s349 = smul.addr %s348, 128
          %s350 = scalar_lea.hbm %s4, %s349
          %s351 = sshll.u32 %s342, 4
          %s352 = int_to_ptr.vmem [resolvable:$true] %s351
          %357 = dma.hbm_to_vmem [thread:$0]  %s350, 2048, %s352, %s339, 128, 128, 8
        $region40: #{tpu_custom_call.1} parent=19 // pred_fallthru
          _
        // Predicated region
        $region41: #{tpu_custom_call.1} parent=19 // pred_check
          %p358 = pneg %p191
        $region42: #{tpu_custom_call.1} parent=19 // pred_check_branch
          %360 = sbr.rel (%p358) target = $region44
        $region43: #{tpu_custom_call.1} parent=19 // pred_region
          %p361 = scmp.lt.s32.totalorder %s32, 1
          %s362 = scalar_select %p361, %s32, 1
          %p363 = scmp.lt.s32.totalorder %s33, 1
          %s364 = scalar_select %p363, %s33, 1
          %s365 = smul.addr %s362, 2
          %s366 = sadd.s32 %s364, %s365
          %s367 = smul.addr %s366, 4
          %s368 = scalar_lea.vmem %s5, %s367
        $region44: #{tpu_custom_call.1} parent=19 // pred_fallthru
          _
      $region20: #{tpu_custom_call.1} parent=5 // pred_fallthru
        _
      %p369 = scmp.le.s32.totalorder 1, %s25
      %p370 = scmp.lt.s32.totalorder %s25, 5
      %p371 = pnand %p369, %p370
      %p372 = pneg %p371
      // Predicated region
      $region45: #{tpu_custom_call.1} parent=5 // pred_check
        _
      $region46: #{tpu_custom_call.1} parent=5 // pred_check_branch
        %374 = sbr.rel (%p371) target = $region48
      $region47: #{tpu_custom_call.1} parent=5 // pred_region
        %s375 = ssub.s32 %s25, 1
        %s376 = sand.u32 %s50, 1
        %s377 = scalar_lea.sflag [#allocation4], %s376
        %s378 = sand.u32 %s50, 1
        %s379 = smul.addr %s378, 16
        %s380 = scalar_lea.vmem [#allocation3], %s379
        // Predicated region
        $region49: #{tpu_custom_call.1} parent=47 // pred_check
          %p381 = pneg %p63
        $region50: #{tpu_custom_call.1} parent=47 // pred_check_branch
          %383 = sbr.rel (%p381) target = $region52
        $region51: #{tpu_custom_call.1} parent=47 // pred_region
          %384 = dma.done %s377, 256
        $region52: #{tpu_custom_call.1} parent=47 // pred_fallthru
          _
        %s385 = sand.u32 %s30, 1
        %s386 = scalar_lea.sflag [#allocation7], %s385
        %s387 = sand.u32 %s76, 1
        %s388 = smul.addr %s387, 16
        %s389 = scalar_lea.vmem [#allocation6], %s388
        // Predicated region
        $region53: #{tpu_custom_call.1} parent=47 // pred_check
          %p390 = pneg %p89
        $region54: #{tpu_custom_call.1} parent=47 // pred_check_branch
          %392 = sbr.rel (%p390) target = $region56
        $region55: #{tpu_custom_call.1} parent=47 // pred_region
          %393 = dma.done %s386, 256
        $region56: #{tpu_custom_call.1} parent=47 // pred_fallthru
          _
        %s394 = sand.u32 %s30, 1
        %s395 = scalar_lea.sflag [#allocation7], %s394
        %s396 = sand.u32 %s102, 1
        %s397 = smul.addr %s396, 128
        %s398 = scalar_lea.vmem [#allocation8], %s397
        // Predicated region
        $region57: #{tpu_custom_call.1} parent=47 // pred_check
          %p399 = pneg %p115
        $region58: #{tpu_custom_call.1} parent=47 // pred_check_branch
          %401 = sbr.rel (%p399) target = $region60
        $region59: #{tpu_custom_call.1} parent=47 // pred_region
          %402 = dma.done %s395, 2048
        $region60: #{tpu_custom_call.1} parent=47 // pred_fallthru
          _
        %s403 = sand.u32 %s156, 1
        %s404 = scalar_lea.sflag [#allocation10], %s403
        %s405 = sand.u32 %s156, 1
        %s406 = smul.addr %s405, 128
        %s407 = scalar_lea.vmem [#allocation9], %s406
        // Predicated region
        $region61: #{tpu_custom_call.1} parent=47 // pred_check
          %p408 = pneg %p169
        $region62: #{tpu_custom_call.1} parent=47 // pred_check_branch
          %410 = sbr.rel (%p408) target = $region64
        $region63: #{tpu_custom_call.1} parent=47 // pred_region
          %411 = dma.done %s404, 2048
        $region64: #{tpu_custom_call.1} parent=47 // pred_fallthru
          _
        %s412 = sand.u32 %s50, 1
        %s413 = scalar_lea.sflag [#allocation4], %s412
        %s414 = sand.u32 %s50, 1
        %s415 = smul.addr %s414, 16
        %s416 = scalar_lea.vmem [#allocation3], %s415
        %p417 = pneg %p63
        %p418 = pneg %p60
        %s419 = sand.u32 %s30, 1
        %s420 = scalar_lea.sflag [#allocation7], %s419
        %s421 = sand.u32 %s76, 1
        %s422 = smul.addr %s421, 16
        %s423 = scalar_lea.vmem [#allocation6], %s422
        %p424 = pneg %p89
        %p425 = pneg %p86
        %s426 = sand.u32 %s30, 1
        %s427 = scalar_lea.sflag [#allocation7], %s426
        %s428 = sand.u32 %s102, 1
        %s429 = smul.addr %s428, 128
        %s430 = scalar_lea.vmem [#allocation8], %s429
        %p431 = pneg %p115
        %p432 = pneg %p112
        %p433 = scmp.lt.s32.totalorder %s34, 1
        %s434 = scalar_select %p433, %s34, 1
        %s435 = scalar_lea.vmem %s3, %s434
        %p436 = pneg %p141
        %p437 = pneg %p138
        %s438 = sand.u32 %s156, 1
        %s439 = scalar_lea.sflag [#allocation10], %s438
        %s440 = sand.u32 %s156, 1
        %s441 = smul.addr %s440, 128
        %s442 = scalar_lea.vmem [#allocation9], %s441
        %p443 = pneg %p169
        %p444 = pneg %p166
        %p445 = scmp.lt.s32.totalorder %s34, 1
        %s446 = scalar_select %p445, %s34, 1
        %p447 = scmp.lt.s32.totalorder %s35, 1
        %s448 = scalar_select %p447, %s35, 1
        %s449 = smul.addr %s446, 2
        %s450 = sadd.s32 %s448, %s449
        %s451 = smul.addr %s450, 4
        %s452 = scalar_lea.vmem %s5, %s451
        %p453 = pneg %p197
        %p454 = pneg %p194
        %p455 = pneg %p218
        %p456 = pneg %p215
        %p457 = pneg %p244
        %p458 = pneg %p241
        %s459 = sand.u32 %s231, 1
        %s460 = scalar_lea.sflag [#allocation5], %s459
        %s461 = sand.u32 %s231, 1
        %s462 = scalar_lea.vmem [#allocation11], %s461
        %p463 = scmp.lt.s32.totalorder %s34, 1
        %s464 = scalar_select %p463, %s34, 1
        %s465 = scalar_lea.vmem %s3, %s464
        %p466 = scmp.lt.s32.totalorder %s34, 1
        %s467 = scalar_select %p466, %s34, 1
        %p468 = scmp.lt.s32.totalorder %s35, 1
        %s469 = scalar_select %p468, %s35, 1
        %s470 = smul.addr %s467, 2
        %s471 = sadd.s32 %s469, %s470
        %s472 = smul.addr %s471, 4
        %s473 = scalar_lea.vmem %s5, %s472
        %p474 = scmp.eq.s32.totalorder %s35, 0
        // Predicated region
        $region65: #{tpu_custom_call.1} parent=47 // pred_check
          %p475 = pneg %p474
        $region66: #{tpu_custom_call.1} parent=47 // pred_check_branch
          %477 = sbr.rel (%p475) target = $region68
        $region67: #{tpu_custom_call.1} parent=47 // pred_region
          %v478 = vld [vmem:[%s380] sm:$0xff]
          %v479 = vld [vmem:[%s380 + $0x8] sm:$0xff]
          %v480 = vld [vmem:[%s398] sm:$0xff]
          %v481 = vld [vmem:[%s398 + $0x8] sm:$0xff]
          %v482 = vld [vmem:[%s398 + $0x10] sm:$0xff]
          %v483 = vld [vmem:[%s398 + $0x18] sm:$0xff]
          %v484 = vld [vmem:[%s398 + $0x20] sm:$0xff]
          %v485 = vld [vmem:[%s398 + $0x28] sm:$0xff]
          %v486 = vld [vmem:[%s398 + $0x30] sm:$0xff]
          %v487 = vld [vmem:[%s398 + $0x38] sm:$0xff]
          %v488 = vld [vmem:[%s398 + $0x40] sm:$0xff]
          %v489 = vld [vmem:[%s398 + $0x48] sm:$0xff]
          %v490 = vld [vmem:[%s398 + $0x50] sm:$0xff]
          %v491 = vld [vmem:[%s398 + $0x58] sm:$0xff]
          %v492 = vld [vmem:[%s398 + $0x60] sm:$0xff]
          %v493 = vld [vmem:[%s398 + $0x68] sm:$0xff]
          %v494 = vld [vmem:[%s398 + $0x70] sm:$0xff]
          %v495 = vld [vmem:[%s398 + $0x78] sm:$0xff]
          %v496 = vld [vmem:[%s465] sm:$0x1]
          %v498 = vlaneseq
          %v499 = vshrl.u32 %v498, 7
          %v500 = vsub.s32 0, %v499
          %v501 = vrot.slane %v496, %v500
          %503 = vmatprep.subr.mxu0 0.0
          %504 = vmatpush1.msra.mxu0 %v480
          %505 = vmatprep.subr.mxu0 0.0
          %506 = vmatpush1.msra.mxu0 %v481
          %507 = vmatprep.subr.mxu0 0.0
          %508 = vmatpush1.msra.mxu0 %v482
          %509 = vmatprep.subr.mxu0 0.0
          %510 = vmatpush1.msra.mxu0 %v483
          %511 = vmatprep.subr.mxu0 0.0
          %512 = vmatpush1.msra.mxu0 %v484
          %513 = vmatprep.subr.mxu0 0.0
          %514 = vmatpush1.msra.mxu0 %v485
          %515 = vmatprep.subr.mxu0 0.0
          %516 = vmatpush1.msra.mxu0 %v486
          %517 = vmatprep.subr.mxu0 0.0
          %518 = vmatpush1.msra.mxu0 %v487
          %519 = vmatprep.subr.mxu0 0.0
          %520 = vmatpush1.msra.mxu0 %v488
          %521 = vmatprep.subr.mxu0 0.0
          %522 = vmatpush1.msra.mxu0 %v489
          %523 = vmatprep.subr.mxu0 0.0
          %524 = vmatpush1.msra.mxu0 %v490
          %525 = vmatprep.subr.mxu0 0.0
          %526 = vmatpush1.msra.mxu0 %v491
          %527 = vmatprep.subr.mxu0 0.0
          %528 = vmatpush1.msra.mxu0 %v492
          %529 = vmatprep.subr.mxu0 0.0
          %530 = vmatpush1.msra.mxu0 %v493
          %531 = vmatprep.subr.mxu0 0.0
          %532 = vmatpush1.msra.mxu0 %v494
          %533 = vmatprep.subr.mxu0 0.0
          %534 = vmatpush1.msra.mxu0 %v495
          %535 = vmatprep.subr.mxu0 0.0
          %536 = vmatpush1.msra.mxu0 0.0
          %537 = vmatprep.subr.mxu0 0.0
          %538 = vmatpush1.msra.mxu0 0.0
          %539 = vmatprep.subr.mxu0 0.0
          %540 = vmatpush1.msra.mxu0 0.0
          %541 = vmatprep.subr.mxu0 0.0
          %542 = vmatpush1.msra.mxu0 0.0
          %543 = vmatprep.subr.mxu0 0.0
          %544 = vmatpush1.msra.mxu0 0.0
          %545 = vmatprep.subr.mxu0 0.0
          %546 = vmatpush1.msra.mxu0 0.0
          %547 = vmatprep.subr.mxu0 0.0
          %548 = vmatpush1.msra.mxu0 0.0
          %549 = vmatprep.subr.mxu0 0.0
          %550 = vmatpush1.msra.mxu0 0.0
          %551 = vmatprep.subr.mxu0 0.0
          %552 = vmatpush1.msra.mxu0 0.0
          %553 = vmatprep.subr.mxu0 0.0
          %554 = vmatpush1.msra.mxu0 0.0
          %555 = vmatprep.subr.mxu0 0.0
          %556 = vmatpush1.msra.mxu0 0.0
          %557 = vmatprep.subr.mxu0 0.0
          %558 = vmatpush1.msra.mxu0 0.0
          %559 = vmatprep.subr.mxu0 0.0
          %560 = vmatpush1.msra.mxu0 0.0
          %561 = vmatprep.subr.mxu0 0.0
          %562 = vmatpush1.msra.mxu0 0.0
          %563 = vmatprep.subr.mxu0 0.0
          %564 = vmatpush1.msra.mxu0 0.0
          %565 = vmatprep.subr.mxu0 0.0
          %566 = vmatpush1.msra.mxu0 0.0
          %567 = vmatprep.mubr.f32.mxu0 0.0
          %568 = vmatmul.mubr.f32.gmra.mrb[0].mxu0 %v478
          %v569 = vpop.f32.mrb[0].mxu0
          %v570 = vadd.f32 %v501, %v569
          %v571 = vpop.f32.mrb[0].mxu0
          %572 = vmatprep.mubr.f32.mxu0 0.0
          %573 = vmatmul.mubr.f32.gmra.mrb[0].mxu0 %v479
          %v574 = vpop.f32.mrb[0].mxu0
          %v575 = vadd.f32 %v501, %v574
          %v576 = vpop.f32.mrb[0].mxu0
          %577 = vdwg.mxu0
          %578 = vst [vmem:[#allocation2] sm:$0xff] %v570
          %579 = vst [vmem:[#allocation2 + $0x8] sm:$0xff] %v575
        $region68: #{tpu_custom_call.1} parent=47 // pred_fallthru
          _
        %v580 = vld [vmem:[#allocation2] sm:$0xff]
        %v581 = vld [vmem:[#allocation2 + $0x8] sm:$0xff]
        %v582 = vld [vmem:[%s389] sm:$0xff]
        %v583 = vld [vmem:[%s389 + $0x8] sm:$0xff]
        %v584 = vld [vmem:[%s407] sm:$0xff]
        %v585 = vld [vmem:[%s407 + $0x8] sm:$0xff]
        %v586 = vld [vmem:[%s407 + $0x10] sm:$0xff]
        %v587 = vld [vmem:[%s407 + $0x18] sm:$0xff]
        %v588 = vld [vmem:[%s407 + $0x20] sm:$0xff]
        %v589 = vld [vmem:[%s407 + $0x28] sm:$0xff]
        %v590 = vld [vmem:[%s407 + $0x30] sm:$0xff]
        %v591 = vld [vmem:[%s407 + $0x38] sm:$0xff]
        %v592 = vld [vmem:[%s407 + $0x40] sm:$0xff]
        %v593 = vld [vmem:[%s407 + $0x48] sm:$0xff]
        %v594 = vld [vmem:[%s407 + $0x50] sm:$0xff]
        %v595 = vld [vmem:[%s407 + $0x58] sm:$0xff]
        %v596 = vld [vmem:[%s407 + $0x60] sm:$0xff]
        %v597 = vld [vmem:[%s407 + $0x68] sm:$0xff]
        %v598 = vld [vmem:[%s407 + $0x70] sm:$0xff]
        %v599 = vld [vmem:[%s407 + $0x78] sm:$0xff]
        %v600 = vld [vmem:[%s473] sm:$0x1]
        %v601 = vld [vmem:[%s473 + $0x1] sm:$0x1]
        %v602 = vld [vmem:[%s473 + $0x2] sm:$0x1]
        %603 = vmatprep.subr.mxu0 0.0
        %604 = vmatpush1.msra.mxu0 %v584
        %605 = vmatprep.subr.mxu0 0.0
        %606 = vmatpush1.msra.mxu0 %v585
        %607 = vmatprep.subr.mxu0 0.0
        %608 = vmatpush1.msra.mxu0 %v586
        %609 = vmatprep.subr.mxu0 0.0
        %610 = vmatpush1.msra.mxu0 %v587
        %611 = vmatprep.subr.mxu0 0.0
        %612 = vmatpush1.msra.mxu0 %v588
        %613 = vmatprep.subr.mxu0 0.0
        %614 = vmatpush1.msra.mxu0 %v589
        %615 = vmatprep.subr.mxu0 0.0
        %616 = vmatpush1.msra.mxu0 %v590
        %617 = vmatprep.subr.mxu0 0.0
        %618 = vmatpush1.msra.mxu0 %v591
        %619 = vmatprep.subr.mxu0 0.0
        %620 = vmatpush1.msra.mxu0 %v592
        %621 = vmatprep.subr.mxu0 0.0
        %622 = vmatpush1.msra.mxu0 %v593
        %623 = vmatprep.subr.mxu0 0.0
        %624 = vmatpush1.msra.mxu0 %v594
        %625 = vmatprep.subr.mxu0 0.0
        %626 = vmatpush1.msra.mxu0 %v595
        %627 = vmatprep.subr.mxu0 0.0
        %628 = vmatpush1.msra.mxu0 %v596
        %629 = vmatprep.subr.mxu0 0.0
        %630 = vmatpush1.msra.mxu0 %v597
        %631 = vmatprep.subr.mxu0 0.0
        %632 = vmatpush1.msra.mxu0 %v598
        %633 = vmatprep.subr.mxu0 0.0
        %634 = vmatpush1.msra.mxu0 %v599
        %635 = vmatprep.subr.mxu0 0.0
        %636 = vmatpush1.msra.mxu0 0.0
        %637 = vmatprep.subr.mxu0 0.0
        %638 = vmatpush1.msra.mxu0 0.0
        %639 = vmatprep.subr.mxu0 0.0
        %640 = vmatpush1.msra.mxu0 0.0
        %641 = vmatprep.subr.mxu0 0.0
        %642 = vmatpush1.msra.mxu0 0.0
        %643 = vmatprep.subr.mxu0 0.0
        %644 = vmatpush1.msra.mxu0 0.0
        %645 = vmatprep.subr.mxu0 0.0
        %646 = vmatpush1.msra.mxu0 0.0
        %647 = vmatprep.subr.mxu0 0.0
        %648 = vmatpush1.msra.mxu0 0.0
        %649 = vmatprep.subr.mxu0 0.0
        %650 = vmatpush1.msra.mxu0 0.0
        %651 = vmatprep.subr.mxu0 0.0
        %652 = vmatpush1.msra.mxu0 0.0
        %653 = vmatprep.subr.mxu0 0.0
        %654 = vmatpush1.msra.mxu0 0.0
        %655 = vmatprep.subr.mxu0 0.0
        %656 = vmatpush1.msra.mxu0 0.0
        %657 = vmatprep.subr.mxu0 0.0
        %658 = vmatpush1.msra.mxu0 0.0
        %659 = vmatprep.subr.mxu0 0.0
        %660 = vmatpush1.msra.mxu0 0.0
        %661 = vmatprep.subr.mxu0 0.0
        %662 = vmatpush1.msra.mxu0 0.0
        %663 = vmatprep.subr.mxu0 0.0
        %664 = vmatpush1.msra.mxu0 0.0
        %665 = vmatprep.subr.mxu0 0.0
        %666 = vmatpush1.msra.mxu0 0.0
        %667 = vmatprep.mubr.f32.mxu0 0.0
        %668 = vmatmul.mubr.f32.gmra.mrb[0].mxu0 %v580
        %v669 = vpop.f32.mrb[0].mxu0
        %v670 = vadd.f32 0.0, %v669
        %v671 = vpop.f32.mrb[0].mxu0
        %672 = vmatprep.mubr.f32.mxu0 0.0
        %673 = vmatmul.mubr.f32.gmra.mrb[0].mxu0 %v581
        %v674 = vpop.f32.mrb[0].mxu0
        %v675 = vadd.f32 0.0, %v674
        %v676 = vpop.f32.mrb[0].mxu0
        %677 = vdwg.mxu0
        %v678 = vlaneseq
        %v679 = vshrl.u32 %v678, 7
        %v680 = vsub.s32 0, %v679
        %v681 = vrot.slane %v600, %v680
        %vm682 = vcmask 130048
        %v684 = vsel %vm682, %v582, 0
        %v687 = vsel %vm682, %v583, 0
        %689 = vmatprep.subr.mxu0 0.0
        %690 = vmatpush1.msra.mxu0 %v670
        %691 = vmatprep.subr.mxu0 0.0
        %692 = vmatpush1.msra.mxu0 %v675
        %693 = vmatprep.subr.mxu0 0.0
        %694 = vmatpush1.msra.mxu0 0.0
        %695 = vmatprep.subr.mxu0 0.0
        %696 = vmatpush1.msra.mxu0 0.0
        %697 = vmatprep.subr.mxu0 0.0
        %698 = vmatpush1.msra.mxu0 0.0
        %699 = vmatprep.subr.mxu0 0.0
        %700 = vmatpush1.msra.mxu0 0.0
        %701 = vmatprep.subr.mxu0 0.0
        %702 = vmatpush1.msra.mxu0 0.0
        %703 = vmatprep.subr.mxu0 0.0
        %704 = vmatpush1.msra.mxu0 0.0
        %705 = vmatprep.subr.mxu0 0.0
        %706 = vmatpush1.msra.mxu0 0.0
        %707 = vmatprep.subr.mxu0 0.0
        %708 = vmatpush1.msra.mxu0 0.0
        %709 = vmatprep.subr.mxu0 0.0
        %710 = vmatpush1.msra.mxu0 0.0
        %711 = vmatprep.subr.mxu0 0.0
        %712 = vmatpush1.msra.mxu0 0.0
        %713 = vmatprep.subr.mxu0 0.0
        %714 = vmatpush1.msra.mxu0 0.0
        %715 = vmatprep.subr.mxu0 0.0
        %716 = vmatpush1.msra.mxu0 0.0
        %717 = vmatprep.subr.mxu0 0.0
        %718 = vmatpush1.msra.mxu0 0.0
        %719 = vmatprep.subr.mxu0 0.0
        %720 = vmatpush1.msra.mxu0 0.0
        %721 = vmatprep.subr.mxu0 0.0
        %722 = vmatpush1.msra.mxu0 0.0
        %723 = vmatprep.subr.mxu0 0.0
        %724 = vmatpush1.msra.mxu0 0.0
        %725 = vmatprep.subr.mxu0 0.0
        %726 = vmatpush1.msra.mxu0 0.0
        %727 = vmatprep.subr.mxu0 0.0
        %728 = vmatpush1.msra.mxu0 0.0
        %729 = vmatprep.subr.mxu0 0.0
        %730 = vmatpush1.msra.mxu0 0.0
        %731 = vmatprep.subr.mxu0 0.0
        %732 = vmatpush1.msra.mxu0 0.0
        %733 = vmatprep.subr.mxu0 0.0
        %734 = vmatpush1.msra.mxu0 0.0
        %735 = vmatprep.subr.mxu0 0.0
        %736 = vmatpush1.msra.mxu0 0.0
        %737 = vmatprep.subr.mxu0 0.0
        %738 = vmatpush1.msra.mxu0 0.0
        %739 = vmatprep.subr.mxu0 0.0
        %740 = vmatpush1.msra.mxu0 0.0
        %741 = vmatprep.subr.mxu0 0.0
        %742 = vmatpush1.msra.mxu0 0.0
        %743 = vmatprep.subr.mxu0 0.0
        %744 = vmatpush1.msra.mxu0 0.0
        %745 = vmatprep.subr.mxu0 0.0
        %746 = vmatpush1.msra.mxu0 0.0
        %747 = vmatprep.subr.mxu0 0.0
        %748 = vmatpush1.msra.mxu0 0.0
        %749 = vmatprep.subr.mxu0 0.0
        %750 = vmatpush1.msra.mxu0 0.0
        %751 = vmatprep.subr.mxu0 0.0
        %752 = vmatpush1.msra.mxu0 0.0
        %753 = vmatprep.mubr.f32.mxu0 0.0
        %754 = vmatmul.mubr.f32.gmra.mrb[0].mxu0 %v684
        %v755 = vpop.f32.mrb[0].mxu0
        %v756 = vadd.f32 %v681, %v755
        %v757 = vpop.f32.mrb[0].mxu0
        %758 = vmatprep.mubr.f32.mxu0 0.0
        %759 = vmatmul.mubr.f32.gmra.mrb[0].mxu0 %v687
        %v760 = vpop.f32.mrb[0].mxu0
        %v761 = vadd.f32 %v681, %v760
        %v762 = vpop.f32.mrb[0].mxu0
        %763 = vdwg.mxu0
        %764 = vadd.xlane.f32.xlu0 %v756
        %v765 = vpop.xlane.xlu0 %764
        %766 = vadd.xlane.f32.xlu0 %v761
        %v767 = vpop.xlane.xlu0 %766
        %v768 = vmul.f32 %v765, 0.03125
        %v769 = vmul.f32 %v767, 0.03125
        %v770 = vmul.f32 %v756, %v756
        %v771 = vmul.f32 %v761, %v761
        %772 = vadd.xlane.f32.xlu0 %v770
        %v773 = vpop.xlane.xlu0 %772
        %774 = vadd.xlane.f32.xlu0 %v771
        %v775 = vpop.xlane.xlu0 %774
        %v776 = vmul.f32 %v773, 0.03125
        %v777 = vmul.f32 %v775, 0.03125
        %v778 = vmul.f32 %v768, %v768
        %v779 = vmul.f32 %v769, %v769
        %v780 = vsub.f32 %v776, %v778
        %v781 = vsub.f32 %v777, %v779
        %v782 = vmax.f32 %v780, 0.0
        %v783 = vmax.f32 %v781, 0.0
        %v784 = vsub.f32 %v756, %v768
        %v785 = vsub.f32 %v761, %v769
        %v786 = vadd.f32 %v782, 1e-05
        %v787 = vadd.f32 %v783, 1e-05
        %v788 = vrsqrt.pop %v786
        %v789 = vrsqrt.pop %v787
        %v790 = vmul.f32 %v784, %v788
        %v791 = vmul.f32 %v785, %v789
        %v792 = vlaneseq
        %v793 = vshrl.u32 %v792, 7
        %v794 = vsub.s32 0, %v793
        %v795 = vrot.slane %v601, %v794
        %v796 = vmul.f32 %v790, %v795
        %v797 = vmul.f32 %v791, %v795
        %v798 = vlaneseq
        %v799 = vshrl.u32 %v798, 7
        %v800 = vsub.s32 0, %v799
        %v801 = vrot.slane %v602, %v800
        %v802 = vadd.f32 %v796, %v801
        %v803 = vadd.f32 %v797, %v801
        %v804 = vmax.f32 %v802, 0.0
        %v805 = vmax.f32 %v803, 0.0
        %v806 = vadd.f32 %v580, %v804
        %v807 = vadd.f32 %v581, %v805
        %808 = vst [vmem:[#allocation2] sm:$0xff] %v806
        %809 = vst [vmem:[#allocation2 + $0x8] sm:$0xff] %v807
        %p810 = scmp.eq.s32.totalorder %s35, 1
        // Predicated region
        $region69: #{tpu_custom_call.1} parent=47 // pred_check
          %p811 = pneg %p810
        $region70: #{tpu_custom_call.1} parent=47 // pred_check_branch
          %813 = sbr.rel (%p811) target = $region72
        $region71: #{tpu_custom_call.1} parent=47 // pred_region
          %v814 = vld [vmem:[#allocation2] sm:$0xff]
          %v815 = vld [vmem:[#allocation2 + $0x8] sm:$0xff]
          %v816 = vld [vmem:[%s6] sm:$0x3]
          %v817 = vlaneseq
          %v818 = vshrl.u32 %v817, 7
          %v819 = vsub.s32 0, %v818
          %v820 = vrot.slane %v816, %v819
          %v821 = vmul.f32 %v814, %v820
          %v822 = vmul.f32 %v815, %v820
          %823 = vadd.xlane.f32.xlu0 %v821
          %v824 = vpop.xlane.xlu0 %823
          %825 = vadd.xlane.f32.xlu0 %v822
          %v826 = vpop.xlane.xlu0 %825
          %v827 = vlaneseq
          %v828 = vshrl.u32 %v827, 7
          %v829 = vsub.s32 1, %v828
          %v830 = vrot.slane %v816, %v829
          %v831 = vadd.f32 %v824, %v830
          %v832 = vadd.f32 %v826, %v830
          %v833 = vlaneseq
          %v834 = vshrl.u32 %v833, 7
          %v835 = vadd.s32 %v834, 8
          %vm836 = vcmp.lt.s32.totalorder %v834, 16
          %vm837 = vcmp.lt.s32.totalorder %v835, 16
          %v838 = vsel %vm836, %v831, -1e+30
          %v839 = vsel %vm837, %v832, -1e+30
          %vm840 = vcmask 7168
          %v841 = vsel %vm840, %v838, -inf
          %v842 = vsel %vm840, %v839, -inf
          %v843 = vmax.f32 %v841, %v842
          %v844 = vrot.slane %v843, 4
          %v845 = vmax.f32 %v843, %v844
          %v846 = vrot.slane %v845, 2
          %v847 = vmax.f32 %v845, %v846
          %v848 = vrot.slane %v847, 1
          %v849 = vmax.f32 %v847, %v848
          %v850 = vsub.f32 %v838, %v849
          %v851 = vsub.f32 %v839, %v849
          %v852 = vmul.f32 %v850, 1.442695
          %v853 = vpow.pop %v852
          %v854 = vmul.f32 %v851, 1.442695
          %v855 = vpow.pop %v854
          %v856 = vsel %vm840, %v853, 0.0
          %v857 = vsel %vm840, %v855, 0.0
          %v858 = vadd.f32 %v856, %v857
          %v859 = vrot.slane %v858, 4
          %v860 = vadd.f32 %v858, %v859
          %v861 = vrot.slane %v860, 2
          %v862 = vadd.f32 %v860, %v861
          %v863 = vrot.slane %v862, 1
          %v864 = vadd.f32 %v862, %v863
          %v865 = vrcp.pop %v864
          %v866 = vmul.f32 %v864, %v865
          %v867 = vsub.f32 2.0, %v866
          %v868 = vmul.f32 %v865, %v867
          %v869 = vmul.f32 %v853, %v868
          %v870 = vmul.f32 %v855, %v868
          %872 = vset.pattern.permute.xlu0 0
          %873 = vperm.xlu0 %872, %v869
          %v874 = vpop.permute.xlu0 %873
          %877 = vset.pattern.permute.xlu0 0
          %878 = vperm.xlu0 %877, %v870
          %v879 = vpop.permute.xlu0 %878
          %v881 = vmul.f32 %v874, %v814
          %v882 = vmul.f32 %v879, %v815
          %v883 = vadd.f32 %v881, %v882
          %v884 = vrot.slane %v883, 4
          %v885 = vadd.f32 %v883, %v884
          %v886 = vrot.slane %v885, 2
          %v887 = vadd.f32 %v885, %v886
          %v888 = vrot.slane %v887, 1
          %v889 = vadd.f32 %v887, %v888
          %890 = vst [vmem:[%s462] sm:$0x1] %v889
        $region72: #{tpu_custom_call.1} parent=47 // pred_fallthru
          _
        %s891 = sand.u32 %s231, 1
        %s892 = scalar_lea.sflag [#allocation5], %s891
        %s893 = sand.u32 %s231, 1
        %s894 = scalar_lea.vmem [#allocation11], %s893
        // Predicated region
        $region73: #{tpu_custom_call.1} parent=47 // pred_check
          %p895 = pneg %p241
        $region74: #{tpu_custom_call.1} parent=47 // pred_check_branch
          %897 = sbr.rel (%p895) target = $region76
        $region75: #{tpu_custom_call.1} parent=47 // pred_region
          %s899 = ssub.s32 16, 16
          %900 = vsyncadd %s892, %s899
          %s901 = smul.addr %s34, 16
          %s902 = scalar_lea.hbm %s7, %s901
          %s904 = sshll.u32 %s894, 4
          %s905 = int_to_ptr.vmem [resolvable:$true] %s904
          %907 = dma.vmem_to_hbm [thread:$0]  %s905, 16, %s902, %s892
        $region76: #{tpu_custom_call.1} parent=47 // pred_fallthru
          _
      $region48: #{tpu_custom_call.1} parent=5 // pred_fallthru
        _
      %p908 = scmp.le.s32.totalorder 2, %s25
      // Predicated region
      $region77: #{tpu_custom_call.1} parent=5 // pred_check
        %p909 = pneg %p908
      $region78: #{tpu_custom_call.1} parent=5 // pred_check_branch
        %911 = sbr.rel (%p909) target = $region80
      $region79: #{tpu_custom_call.1} parent=5 // pred_region
        %s912 = ssub.s32 %s25, 2
        // Predicated region
        $region81: #{tpu_custom_call.1} parent=79 // pred_check
          %p913 = pneg %p247
        $region82: #{tpu_custom_call.1} parent=79 // pred_check_branch
          %915 = sbr.rel (%p913) target = $region84
        $region83: #{tpu_custom_call.1} parent=79 // pred_region
          %s916 = sand.u32 %s232, 1
          %s917 = scalar_lea.sflag [#allocation5], %s916
          %s918 = sand.u32 %s232, 1
          %s919 = scalar_lea.vmem [#allocation11], %s918
          %920 = dma.done %s917, 16
        $region84: #{tpu_custom_call.1} parent=79 // pred_fallthru
          _
      $region80: #{tpu_custom_call.1} parent=5 // pred_fallthru
        _
    $region6: #{tpu_custom_call.1} parent=1 // loop_footer
      %s29 = sadd.s32 1, %s25
    $region7: #{tpu_custom_call.1} parent=1 // loop_footer_branch
      %24 = sbr.rel target = $region3
    $region8: #{tpu_custom_call.1} parent=1 // loop_exit
      _
    %921 = vsyncpa [#allocation4], 1
    %s922 = scalar_lea.sflag [#allocation4], 1
    %923 = vsyncpa %s922, 1
    %924 = vsyncpa [#allocation7], 1
    %s925 = scalar_lea.sflag [#allocation7], 1
    %926 = vsyncpa %s925, 1
    %927 = vsyncpa [#allocation10], 1
    %s928 = scalar_lea.sflag [#allocation10], 1
    %929 = vsyncpa %s928, 1
    %930 = vsyncpa [#allocation5], 1
    %s931 = scalar_lea.sflag [#allocation5], 1
    %932 = vsyncpa %s931, 1

</llo_original>
